<compile_context>
chip_gen: v5e
topology: v5e:2x2
jax: 0.10.0
libtpu: 0.0.40
codegen_flags: <defaults>
</compile_context>

<pallas_src>
import functools

import jax
import jax.numpy as jnp
from jax import lax
from jax.experimental import pallas as pl
from jax.experimental.pallas import tpu as pltpu

LANES = 128
SUBS = 8
MAX_ROWS_PER_BLOCK = 64


def _round_up(x, m):
    return (x + m - 1) // m * m


def _sigmoid(x):
    # sigmoid(x) == 0.5*tanh(0.5*x) + 0.5 : one EUP transcendental per vreg
    # (instead of exp + divide), keeping the streaming loop memory-bound.
    return 0.5 * jnp.tanh(0.5 * x) + 0.5


def _iou_sums_kernel(p_ref, t_ref, out_ref, *, nk_per, m_valid, need_mask):
    """Accumulate raw per-row sums of (sigmoid(p)*t, sigmoid(p), t).

    p_ref / t_ref : (RB, TM, 128) input blocks (any float dtype, upcast to f32).
    out_ref       : (RB, 1, 3, 8, 128) f32, resident across the reduction axis.
    Label smoothing is applied in the wrapper (affine map of these raw sums).
    """
    @pl.when(pl.program_id(2) == 0)
    def _():
        out_ref[...] = jnp.zeros_like(out_ref)

    rb, tm, _ = p_ref.shape
    g = tm // SUBS          # full (8,128) chunks per row
    tail = tm % SUBS        # leftover sublanes (only when tm == full pixel extent)
    # Logical offset of this block along the (H*W)//128 axis.
    base = (pl.program_id(1) * nk_per + pl.program_id(2)) * tm
    if need_mask:
        iota = lax.broadcasted_iota(jnp.int32, (SUBS, LANES), 0)

    for r in range(rb):
        if g > 0:
            def chunk(j, carry, r=r):
                inter, a, b = carry
                off = pl.multiple_of(j * SUBS, SUBS)
                p = _sigmoid(p_ref[r, pl.ds(off, SUBS), :].astype(jnp.float32))
                t = t_ref[r, pl.ds(off, SUBS), :].astype(jnp.float32)
                if need_mask:
                    valid = (base + off + iota) < m_valid
                    p = jnp.where(valid, p, 0.0)
                    t = jnp.where(valid, t, 0.0)
                return inter + p * t, a + p, b + t

            zero = jnp.zeros((SUBS, LANES), jnp.float32)
            inter, a, b = lax.fori_loop(0, g, chunk, (zero, zero, zero),
                                        unroll=min(g, 8))
            out_ref[r, 0, 0] += inter
            out_ref[r, 0, 1] += a
            out_ref[r, 0, 2] += b

        if tail:
            # Only reached when the block covers the full (unmasked) pixel extent.
            sl = pl.ds(g * SUBS, tail)
            p = _sigmoid(p_ref[r, sl, :].astype(jnp.float32))
            t = t_ref[r, sl, :].astype(jnp.float32)
            out_ref[r, 0, 0, :tail, :] += p * t
            out_ref[r, 0, 1, :tail, :] += p
            out_ref[r, 0, 2, :tail, :] += t


def iou_loss(pred, target, *, smooth=1.0, outchannels=None, label_smoothing=0.0,
             masked=False, target_sublanes=None):
    """pred, target: NCHW float arrays. Returns the per-channel iou loss (C,)."""
    if masked:
        # TODO(synk): masked=True (mask = sum(target, dim=1) == 1) not implemented.
        raise NotImplementedError("masked=True is not supported by this kernel")
    B, C, H, W = pred.shape
    if outchannels is None:
        outchannels = C
    if label_smoothing >= 1.0:
        raise ValueError("label_smoothing must be < 1.0")

    R = B * C
    S = H * W

    # Free reshape (no transpose, no copy): one row per (batch, channel) pair.
    p = pred.reshape(R, S)
    t = target.reshape(R, S)

    # Lane alignment.  When H*W is a multiple of 128 (common case) this is a
    # zero-copy view; otherwise pad only to the next multiple of 128.  Raw sums
    # are accumulated in-kernel, so t-pad == 0 contributes nothing and
    # sigmoid(-inf) == 0 kills the pred pad exactly (any float dtype).
    # TODO(synk): mask the lane tail in-kernel to avoid this copy entirely.
    S128 = _round_up(S, LANES)
    if S128 != S:
        p = jnp.pad(p, ((0, 0), (0, S128 - S)), constant_values=float("-inf"))
        t = jnp.pad(t, ((0, 0), (0, S128 - S)), constant_values=0.0)
    m = S128 // LANES
    p = p.reshape(R, m, LANES)
    t = t.reshape(R, m, LANES)

    # ~4 MiB per input block per buffer; 2 inputs x 2 buffers + accumulators stays
    # well under the 32 MiB VMEM limit on every generation (v7x: 64 MiB physical).
    if target_sublanes is None:
        target_sublanes = 8192 if pred.dtype.itemsize >= 4 else 16384
    target_sublanes = max(SUBS, int(target_sublanes))

    if m > target_sublanes:
        # Large images: one (b, c) row per block, split the pixel axis.
        rb = 1
        nk = pl.cdiv(m, target_sublanes)
        tm = _round_up(pl.cdiv(m, nk), SUBS)
        nk = pl.cdiv(m, tm)
    else:
        # Small images: whole pixel extent per row, several rows per block so
        # each DMA stays large enough to amortize the per-grid-step overhead.
        tm = m
        rb = min(R, MAX_ROWS_PER_BLOCK,
                 max(1, target_sublanes // _round_up(m, SUBS)))
        nk = 1
    nrb = pl.cdiv(R, rb)

    # v7x megacore: when the row axis cannot be sharded across the two cores,
    # split the reduction axis into two independent accumulator slots instead
    # (harmless on single-core v5e/v6e).  Never create a fully out-of-bounds block.
    npar, nk_per = 1, nk
    if nrb == 1 and nk >= 2:
        cand = pl.cdiv(nk, 2)
        if (2 * cand - 1) * tm < m:
            npar, nk_per = 2, cand

    need_mask = npar * nk_per * tm > m

    kernel = functools.partial(_iou_sums_kernel, nk_per=nk_per, m_valid=m,
                               need_mask=need_mask)

    partials = pl.pallas_call(
        kernel,
        out_shape=jax.ShapeDtypeStruct((nrb * rb, npar, 3, SUBS, LANES),
                                       jnp.float32),
        grid_spec=pltpu.PrefetchScalarGridSpec(
            num_scalar_prefetch=0,
            grid=(nrb, npar, nk_per),
            in_specs=[
                pl.BlockSpec((rb, tm, LANES),
                             lambda r, s, k: (r, s * nk_per + k, 0)),
                pl.BlockSpec((rb, tm, LANES),
                             lambda r, s, k: (r, s * nk_per + k, 0)),
            ],
            out_specs=pl.BlockSpec((rb, 1, 3, SUBS, LANES),
                                   lambda r, s, k: (r, s, 0, 0, 0)),
        ),
        compiler_params=pltpu.CompilerParams(
            dimension_semantics=("parallel", "parallel", "arbitrary"),
            vmem_limit_bytes=32 * 1024 * 1024,
        ),
    )(p, t)

    # Tiny wrapper-side reduction: (rows, npar, 3, 8, 128) -> per-channel (C, 3).
    sums = partials[:R].sum(axis=(1, 3, 4)).reshape(B, C, 3).sum(axis=0)
    inter_raw, a_sum, b_raw = sums[:, 0], sums[:, 1], sums[:, 2]

    # Label smoothing as an exact affine map of the raw sums: t' = (1-ls)*t + ls/K.
    ls = float(label_smoothing)
    kch = float(outchannels)
    n_pix = float(B) * float(H) * float(W)      # valid pixels reduced per channel
    inter = (1.0 - ls) * inter_raw + (ls / kch) * a_sum
    b_sum = (1.0 - ls) * b_raw + (ls / kch) * n_pix
    union = a_sum + b_sum - inter
    return 1.0 - (inter + smooth) / (union + smooth)


def iou_loss_reference(pred, target, *, smooth=1.0, outchannels=None,
                       label_smoothing=0.0):
    B, C, H, W = pred.shape
    if outchannels is None:
        outchannels = C
    p = jax.nn.sigmoid(pred.astype(jnp.float32))
    t = target.astype(jnp.float32)
    t = t * (1.0 - label_smoothing) + label_smoothing / outchannels
    inter = jnp.sum(p * t, axis=(0, 2, 3))
    a = jnp.sum(p, axis=(0, 2, 3))
    b = jnp.sum(t, axis=(0, 2, 3))
    union = a + b - inter
    return 1.0 - (inter + smooth) / (union + smooth)


def _check(out, ref, name, rtol=1e-5, atol=1e-5):
    out = jax.block_until_ready(out)
    assert out.shape == ref.shape, (name, out.shape, ref.shape)
    assert jnp.allclose(out, ref, rtol=rtol, atol=atol), (name, out, ref)


if __name__ == "__main__":
    key = jax.random.PRNGKey(0)

    # 1) Default config, 128-aligned spatial size (zero-copy path).
    B, C, H, W = 2, 4, 16, 16
    k1, k2 = jax.random.split(key)
    pred = jax.random.normal(k1, (B, C, H, W), dtype=jnp.float32)
    target = jax.random.bernoulli(k2, 0.3, (B, C, H, W)).astype(jnp.float32)
    out = iou_loss(pred, target, smooth=1.0, outchannels=C)
    _check(out, iou_loss_reference(pred, target, smooth=1.0, outchannels=C), "base")

    # 2) Label smoothing (hoisted affine path).
    out = iou_loss(pred, target, smooth=1.0, outchannels=C, label_smoothing=0.1)
    _check(out, iou_loss_reference(pred, target, smooth=1.0, outchannels=C,
                                   label_smoothing=0.1), "label_smoothing")

    # 3) Non-128-multiple H*W (lane-pad fallback path).
    k3, k4 = jax.random.split(k1)
    pred3 = jax.random.normal(k3, (2, 3, 10, 10), dtype=jnp.float32)
    target3 = jax.random.bernoulli(k4, 0.3, (2, 3, 10, 10)).astype(jnp.float32)
    out = iou_loss(pred3, target3, smooth=1.0, label_smoothing=0.05)
    _check(out, iou_loss_reference(pred3, target3, smooth=1.0,
                                   label_smoothing=0.05), "unaligned")

    # 4) bf16 inputs (halved HBM traffic; f32 accumulation in kernel).
    out = iou_loss(pred.astype(jnp.bfloat16), target.astype(jnp.bfloat16),
                   smooth=1.0, outchannels=C)
    _check(out, iou_loss_reference(pred.astype(jnp.bfloat16),
                                   target.astype(jnp.bfloat16),
                                   smooth=1.0, outchannels=C),
           "bf16", rtol=1e-3, atol=1e-3)

    # 5) Multi-k-block path with ragged-tail masking (tiny tile override).
    k5, k6 = jax.random.split(k2)
    pred5 = jax.random.normal(k5, (2, 4, 48, 48), dtype=jnp.float32)
    target5 = jax.random.bernoulli(k6, 0.3, (2, 4, 48, 48)).astype(jnp.float32)
    out = iou_loss(pred5, target5, smooth=1.0, target_sublanes=8)
    _check(out, iou_loss_reference(pred5, target5, smooth=1.0), "masked_tail")

    # 6) Single (b, c) row: reduction axis split across the two accumulator slots.
    k7, k8 = jax.random.split(k5)
    pred6 = jax.random.normal(k7, (1, 1, 64, 64), dtype=jnp.float32)
    target6 = jax.random.bernoulli(k8, 0.5, (1, 1, 64, 64)).astype(jnp.float32)
    out = iou_loss(pred6, target6, smooth=1.0, target_sublanes=8)
    _check(out, iou_loss_reference(pred6, target6, smooth=1.0), "split_k")

    print("KERNEL_OK")
</pallas_src>

<mosaic_0001>
module attributes {stable_mosaic.version = 11 : i64} {
  func.func @_iou_sums_kernel(%arg0: i32, %arg1: i32, %arg2: i32, %arg3: memref<8x2x128xf32, #tpu.memory_space<vmem>>, %arg4: memref<8x2x128xf32, #tpu.memory_space<vmem>>, %arg5: memref<8x1x3x8x128xf32, #tpu.memory_space<vmem>>) attributes {dimension_semantics = [#tpu.dimension_semantics<parallel>, #tpu.dimension_semantics<parallel>, #tpu.dimension_semantics<arbitrary>], iteration_bounds = array<i64: 1, 1, 1>, scalar_prefetch = 0 : i64, scratch_operands = 0 : i64, tpu.core_type = #tpu.core_type<tc>, window_params = [{transform_indices = @transform_0, window_bounds = array<i64: 8, 2, 128>}, {transform_indices = @transform_1, window_bounds = array<i64: 8, 2, 128>}, {transform_indices = @transform_2, window_bounds = array<i64: 8, 1, 3, 8, 128>}]} {
    %c0_i32 = arith.constant 0 : i32
    %0 = arith.cmpi eq, %arg2, %c0_i32 : i32
    %1 = arith.extui %0 : i1 to i32
    %c0_i32_0 = arith.constant 0 : i32
    %2 = arith.cmpi ne, %1, %c0_i32_0 : i32
    scf.if %2 {
      %cst_304 = arith.constant 0.000000e+00 : f32
      %243 = vector.broadcast %cst_304 : f32 to vector<8x1x3x8x128xf32>
      %c0_305 = arith.constant 0 : index
      %c0_306 = arith.constant 0 : index
      %c0_307 = arith.constant 0 : index
      %c0_308 = arith.constant 0 : index
      %c0_309 = arith.constant 0 : index
      %244 = vector.load %arg5[%c0_305, %c0_306, %c0_307, %c0_308, %c0_309] : memref<8x1x3x8x128xf32, #tpu.memory_space<vmem>>, vector<8x1x3x8x128xf32>
      tpu.vector_store %arg5[%c0_305, %c0_306, %c0_307, %c0_308, %c0_309], %243 {strides = array<i32>} : memref<8x1x3x8x128xf32, #tpu.memory_space<vmem>>, vector<8x1x3x8x128xf32>,
    } else {
    }
    %c0 = arith.constant 0 : index
    %c0_1 = arith.constant 0 : index
    %c0_2 = arith.constant 0 : index
    %3 = vector.load %arg3[%c0, %c0_1, %c0_2] : memref<8x2x128xf32, #tpu.memory_space<vmem>>, vector<1x2x128xf32>
    %4 = vector.shape_cast %3 : vector<1x2x128xf32> to vector<2x128xf32>
    %cst = arith.constant 5.000000e-01 : f32
    %5 = vector.broadcast %cst : f32 to vector<2x128xf32>
    %6 = arith.mulf %5, %4 : vector<2x128xf32>
    %7 = math.tanh %6 : vector<2x128xf32>
    %cst_3 = arith.constant 5.000000e-01 : f32
    %8 = vector.broadcast %cst_3 : f32 to vector<2x128xf32>
    %9 = arith.mulf %8, %7 : vector<2x128xf32>
    %cst_4 = arith.constant 5.000000e-01 : f32
    %10 = vector.broadcast %cst_4 : f32 to vector<2x128xf32>
    %11 = arith.addf %9, %10 : vector<2x128xf32>
    %c0_5 = arith.constant 0 : index
    %c0_6 = arith.constant 0 : index
    %c0_7 = arith.constant 0 : index
    %12 = vector.load %arg4[%c0_5, %c0_6, %c0_7] : memref<8x2x128xf32, #tpu.memory_space<vmem>>, vector<1x2x128xf32>
    %13 = vector.shape_cast %12 : vector<1x2x128xf32> to vector<2x128xf32>
    %c0_8 = arith.constant 0 : index
    %c0_9 = arith.constant 0 : index
    %c0_10 = arith.constant 0 : index
    %c0_11 = arith.constant 0 : index
    %c0_12 = arith.constant 0 : index
    %14 = vector.load %arg5[%c0_8, %c0_9, %c0_10, %c0_11, %c0_12] : memref<8x1x3x8x128xf32, #tpu.memory_space<vmem>>, vector<1x1x1x2x128xf32>
    %15 = vector.shape_cast %14 : vector<1x1x1x2x128xf32> to vector<2x128xf32>
    %16 = arith.mulf %11, %13 : vector<2x128xf32>
    %17 = arith.addf %15, %16 : vector<2x128xf32>
    %c0_13 = arith.constant 0 : index
    %c0_14 = arith.constant 0 : index
    %c0_15 = arith.constant 0 : index
    %c0_16 = arith.constant 0 : index
    %c0_17 = arith.constant 0 : index
    %18 = vector.load %arg5[%c0_13, %c0_14, %c0_15, %c0_16, %c0_17] : memref<8x1x3x8x128xf32, #tpu.memory_space<vmem>>, vector<1x1x1x2x128xf32>
    %19 = vector.shape_cast %18 : vector<1x1x1x2x128xf32> to vector<2x128xf32>
    %20 = vector.shape_cast %17 : vector<2x128xf32> to vector<1x1x1x2x128xf32>
    tpu.vector_store %arg5[%c0_13, %c0_14, %c0_15, %c0_16, %c0_17], %20 {strides = array<i32>} : memref<8x1x3x8x128xf32, #tpu.memory_space<vmem>>, vector<1x1x1x2x128xf32>,
    %c0_18 = arith.constant 0 : index
    %c0_19 = arith.constant 0 : index
    %c1 = arith.constant 1 : index
    %c0_20 = arith.constant 0 : index
    %c0_21 = arith.constant 0 : index
    %21 = vector.load %arg5[%c0_18, %c0_19, %c1, %c0_20, %c0_21] : memref<8x1x3x8x128xf32, #tpu.memory_space<vmem>>, vector<1x1x1x2x128xf32>
    %22 = vector.shape_cast %21 : vector<1x1x1x2x128xf32> to vector<2x128xf32>
    %23 = arith.addf %22, %11 : vector<2x128xf32>
    %c0_22 = arith.constant 0 : index
    %c0_23 = arith.constant 0 : index
    %c1_24 = arith.constant 1 : index
    %c0_25 = arith.constant 0 : index
    %c0_26 = arith.constant 0 : index
    %24 = vector.load %arg5[%c0_22, %c0_23, %c1_24, %c0_25, %c0_26] : memref<8x1x3x8x128xf32, #tpu.memory_space<vmem>>, vector<1x1x1x2x128xf32>
    %25 = vector.shape_cast %24 : vector<1x1x1x2x128xf32> to vector<2x128xf32>
    %26 = vector.shape_cast %23 : vector<2x128xf32> to vector<1x1x1x2x128xf32>
    tpu.vector_store %arg5[%c0_22, %c0_23, %c1_24, %c0_25, %c0_26], %26 {strides = array<i32>} : memref<8x1x3x8x128xf32, #tpu.memory_space<vmem>>, vector<1x1x1x2x128xf32>,
    %c0_27 = arith.constant 0 : index
    %c0_28 = arith.constant 0 : index
    %c2 = arith.constant 2 : index
    %c0_29 = arith.constant 0 : index
    %c0_30 = arith.constant 0 : index
    %27 = vector.load %arg5[%c0_27, %c0_28, %c2, %c0_29, %c0_30] : memref<8x1x3x8x128xf32, #tpu.memory_space<vmem>>, vector<1x1x1x2x128xf32>
    %28 = vector.shape_cast %27 : vector<1x1x1x2x128xf32> to vector<2x128xf32>
    %29 = arith.addf %28, %13 : vector<2x128xf32>
    %c0_31 = arith.constant 0 : index
    %c0_32 = arith.constant 0 : index
    %c2_33 = arith.constant 2 : index
    %c0_34 = arith.constant 0 : index
    %c0_35 = arith.constant 0 : index
    %30 = vector.load %arg5[%c0_31, %c0_32, %c2_33, %c0_34, %c0_35] : memref<8x1x3x8x128xf32, #tpu.memory_space<vmem>>, vector<1x1x1x2x128xf32>
    %31 = vector.shape_cast %30 : vector<1x1x1x2x128xf32> to vector<2x128xf32>
    %32 = vector.shape_cast %29 : vector<2x128xf32> to vector<1x1x1x2x128xf32>
    tpu.vector_store %arg5[%c0_31, %c0_32, %c2_33, %c0_34, %c0_35], %32 {strides = array<i32>} : memref<8x1x3x8x128xf32, #tpu.memory_space<vmem>>, vector<1x1x1x2x128xf32>,
    %c1_36 = arith.constant 1 : index
    %c0_37 = arith.constant 0 : index
    %c0_38 = arith.constant 0 : index
    %33 = vector.load %arg3[%c1_36, %c0_37, %c0_38] : memref<8x2x128xf32, #tpu.memory_space<vmem>>, vector<1x2x128xf32>
    %34 = vector.shape_cast %33 : vector<1x2x128xf32> to vector<2x128xf32>
    %cst_39 = arith.constant 5.000000e-01 : f32
    %35 = vector.broadcast %cst_39 : f32 to vector<2x128xf32>
    %36 = arith.mulf %35, %34 : vector<2x128xf32>
    %37 = math.tanh %36 : vector<2x128xf32>
    %cst_40 = arith.constant 5.000000e-01 : f32
    %38 = vector.broadcast %cst_40 : f32 to vector<2x128xf32>
    %39 = arith.mulf %38, %37 : vector<2x128xf32>
    %cst_41 = arith.constant 5.000000e-01 : f32
    %40 = vector.broadcast %cst_41 : f32 to vector<2x128xf32>
    %41 = arith.addf %39, %40 : vector<2x128xf32>
    %c1_42 = arith.constant 1 : index
    %c0_43 = arith.constant 0 : index
    %c0_44 = arith.constant 0 : index
    %42 = vector.load %arg4[%c1_42, %c0_43, %c0_44] : memref<8x2x128xf32, #tpu.memory_space<vmem>>, vector<1x2x128xf32>
    %43 = vector.shape_cast %42 : vector<1x2x128xf32> to vector<2x128xf32>
    %c1_45 = arith.constant 1 : index
    %c0_46 = arith.constant 0 : index
    %c0_47 = arith.constant 0 : index
    %c0_48 = arith.constant 0 : index
    %c0_49 = arith.constant 0 : index
    %44 = vector.load %arg5[%c1_45, %c0_46, %c0_47, %c0_48, %c0_49] : memref<8x1x3x8x128xf32, #tpu.memory_space<vmem>>, vector<1x1x1x2x128xf32>
    %45 = vector.shape_cast %44 : vector<1x1x1x2x128xf32> to vector<2x128xf32>
    %46 = arith.mulf %41, %43 : vector<2x128xf32>
    %47 = arith.addf %45, %46 : vector<2x128xf32>
    %c1_50 = arith.constant 1 : index
    %c0_51 = arith.constant 0 : index
    %c0_52 = arith.constant 0 : index
    %c0_53 = arith.constant 0 : index
    %c0_54 = arith.constant 0 : index
    %48 = vector.load %arg5[%c1_50, %c0_51, %c0_52, %c0_53, %c0_54] : memref<8x1x3x8x128xf32, #tpu.memory_space<vmem>>, vector<1x1x1x2x128xf32>
    %49 = vector.shape_cast %48 : vector<1x1x1x2x128xf32> to vector<2x128xf32>
    %50 = vector.shape_cast %47 : vector<2x128xf32> to vector<1x1x1x2x128xf32>
    tpu.vector_store %arg5[%c1_50, %c0_51, %c0_52, %c0_53, %c0_54], %50 {strides = array<i32>} : memref<8x1x3x8x128xf32, #tpu.memory_space<vmem>>, vector<1x1x1x2x128xf32>,
    %c1_55 = arith.constant 1 : index
    %c0_56 = arith.constant 0 : index
    %c1_57 = arith.constant 1 : index
    %c0_58 = arith.constant 0 : index
    %c0_59 = arith.constant 0 : index
    %51 = vector.load %arg5[%c1_55, %c0_56, %c1_57, %c0_58, %c0_59] : memref<8x1x3x8x128xf32, #tpu.memory_space<vmem>>, vector<1x1x1x2x128xf32>
    %52 = vector.shape_cast %51 : vector<1x1x1x2x128xf32> to vector<2x128xf32>
    %53 = arith.addf %52, %41 : vector<2x128xf32>
    %c1_60 = arith.constant 1 : index
    %c0_61 = arith.constant 0 : index
    %c1_62 = arith.constant 1 : index
    %c0_63 = arith.constant 0 : index
    %c0_64 = arith.constant 0 : index
    %54 = vector.load %arg5[%c1_60, %c0_61, %c1_62, %c0_63, %c0_64] : memref<8x1x3x8x128xf32, #tpu.memory_space<vmem>>, vector<1x1x1x2x128xf32>
    %55 = vector.shape_cast %54 : vector<1x1x1x2x128xf32> to vector<2x128xf32>
    %56 = vector.shape_cast %53 : vector<2x128xf32> to vector<1x1x1x2x128xf32>
    tpu.vector_store %arg5[%c1_60, %c0_61, %c1_62, %c0_63, %c0_64], %56 {strides = array<i32>} : memref<8x1x3x8x128xf32, #tpu.memory_space<vmem>>, vector<1x1x1x2x128xf32>,
    %c1_65 = arith.constant 1 : index
    %c0_66 = arith.constant 0 : index
    %c2_67 = arith.constant 2 : index
    %c0_68 = arith.constant 0 : index
    %c0_69 = arith.constant 0 : index
    %57 = vector.load %arg5[%c1_65, %c0_66, %c2_67, %c0_68, %c0_69] : memref<8x1x3x8x128xf32, #tpu.memory_space<vmem>>, vector<1x1x1x2x128xf32>
    %58 = vector.shape_cast %57 : vector<1x1x1x2x128xf32> to vector<2x128xf32>
    %59 = arith.addf %58, %43 : vector<2x128xf32>
    %c1_70 = arith.constant 1 : index
    %c0_71 = arith.constant 0 : index
    %c2_72 = arith.constant 2 : index
    %c0_73 = arith.constant 0 : index
    %c0_74 = arith.constant 0 : index
    %60 = vector.load %arg5[%c1_70, %c0_71, %c2_72, %c0_73, %c0_74] : memref<8x1x3x8x128xf32, #tpu.memory_space<vmem>>, vector<1x1x1x2x128xf32>
    %61 = vector.shape_cast %60 : vector<1x1x1x2x128xf32> to vector<2x128xf32>
    %62 = vector.shape_cast %59 : vector<2x128xf32> to vector<1x1x1x2x128xf32>
    tpu.vector_store %arg5[%c1_70, %c0_71, %c2_72, %c0_73, %c0_74], %62 {strides = array<i32>} : memref<8x1x3x8x128xf32, #tpu.memory_space<vmem>>, vector<1x1x1x2x128xf32>,
    %c2_75 = arith.constant 2 : index
    %c0_76 = arith.constant 0 : index
    %c0_77 = arith.constant 0 : index
    %63 = vector.load %arg3[%c2_75, %c0_76, %c0_77] : memref<8x2x128xf32, #tpu.memory_space<vmem>>, vector<1x2x128xf32>
    %64 = vector.shape_cast %63 : vector<1x2x128xf32> to vector<2x128xf32>
    %cst_78 = arith.constant 5.000000e-01 : f32
    %65 = vector.broadcast %cst_78 : f32 to vector<2x128xf32>
    %66 = arith.mulf %65, %64 : vector<2x128xf32>
    %67 = math.tanh %66 : vector<2x128xf32>
    %cst_79 = arith.constant 5.000000e-01 : f32
    %68 = vector.broadcast %cst_79 : f32 to vector<2x128xf32>
    %69 = arith.mulf %68, %67 : vector<2x128xf32>
    %cst_80 = arith.constant 5.000000e-01 : f32
    %70 = vector.broadcast %cst_80 : f32 to vector<2x128xf32>
    %71 = arith.addf %69, %70 : vector<2x128xf32>
    %c2_81 = arith.constant 2 : index
    %c0_82 = arith.constant 0 : index
    %c0_83 = arith.constant 0 : index
    %72 = vector.load %arg4[%c2_81, %c0_82, %c0_83] : memref<8x2x128xf32, #tpu.memory_space<vmem>>, vector<1x2x128xf32>
    %73 = vector.shape_cast %72 : vector<1x2x128xf32> to vector<2x128xf32>
    %c2_84 = arith.constant 2 : index
    %c0_85 = arith.constant 0 : index
    %c0_86 = arith.constant 0 : index
    %c0_87 = arith.constant 0 : index
    %c0_88 = arith.constant 0 : index
    %74 = vector.load %arg5[%c2_84, %c0_85, %c0_86, %c0_87, %c0_88] : memref<8x1x3x8x128xf32, #tpu.memory_space<vmem>>, vector<1x1x1x2x128xf32>
    %75 = vector.shape_cast %74 : vector<1x1x1x2x128xf32> to vector<2x128xf32>
    %76 = arith.mulf %71, %73 : vector<2x128xf32>
    %77 = arith.addf %75, %76 : vector<2x128xf32>
    %c2_89 = arith.constant 2 : index
    %c0_90 = arith.constant 0 : index
    %c0_91 = arith.constant 0 : index
    %c0_92 = arith.constant 0 : index
    %c0_93 = arith.constant 0 : index
    %78 = vector.load %arg5[%c2_89, %c0_90, %c0_91, %c0_92, %c0_93] : memref<8x1x3x8x128xf32, #tpu.memory_space<vmem>>, vector<1x1x1x2x128xf32>
    %79 = vector.shape_cast %78 : vector<1x1x1x2x128xf32> to vector<2x128xf32>
    %80 = vector.shape_cast %77 : vector<2x128xf32> to vector<1x1x1x2x128xf32>
    tpu.vector_store %arg5[%c2_89, %c0_90, %c0_91, %c0_92, %c0_93], %80 {strides = array<i32>} : memref<8x1x3x8x128xf32, #tpu.memory_space<vmem>>, vector<1x1x1x2x128xf32>,
    %c2_94 = arith.constant 2 : index
    %c0_95 = arith.constant 0 : index
    %c1_96 = arith.constant 1 : index
    %c0_97 = arith.constant 0 : index
    %c0_98 = arith.constant 0 : index
    %81 = vector.load %arg5[%c2_94, %c0_95, %c1_96, %c0_97, %c0_98] : memref<8x1x3x8x128xf32, #tpu.memory_space<vmem>>, vector<1x1x1x2x128xf32>
    %82 = vector.shape_cast %81 : vector<1x1x1x2x128xf32> to vector<2x128xf32>
    %83 = arith.addf %82, %71 : vector<2x128xf32>
    %c2_99 = arith.constant 2 : index
    %c0_100 = arith.constant 0 : index
    %c1_101 = arith.constant 1 : index
    %c0_102 = arith.constant 0 : index
    %c0_103 = arith.constant 0 : index
    %84 = vector.load %arg5[%c2_99, %c0_100, %c1_101, %c0_102, %c0_103] : memref<8x1x3x8x128xf32, #tpu.memory_space<vmem>>, vector<1x1x1x2x128xf32>
    %85 = vector.shape_cast %84 : vector<1x1x1x2x128xf32> to vector<2x128xf32>
    %86 = vector.shape_cast %83 : vector<2x128xf32> to vector<1x1x1x2x128xf32>
    tpu.vector_store %arg5[%c2_99, %c0_100, %c1_101, %c0_102, %c0_103], %86 {strides = array<i32>} : memref<8x1x3x8x128xf32, #tpu.memory_space<vmem>>, vector<1x1x1x2x128xf32>,
    %c2_104 = arith.constant 2 : index
    %c0_105 = arith.constant 0 : index
    %c2_106 = arith.constant 2 : index
    %c0_107 = arith.constant 0 : index
    %c0_108 = arith.constant 0 : index
    %87 = vector.load %arg5[%c2_104, %c0_105, %c2_106, %c0_107, %c0_108] : memref<8x1x3x8x128xf32, #tpu.memory_space<vmem>>, vector<1x1x1x2x128xf32>
    %88 = vector.shape_cast %87 : vector<1x1x1x2x128xf32> to vector<2x128xf32>
    %89 = arith.addf %88, %73 : vector<2x128xf32>
    %c2_109 = arith.constant 2 : index
    %c0_110 = arith.constant 0 : index
    %c2_111 = arith.constant 2 : index
    %c0_112 = arith.constant 0 : index
    %c0_113 = arith.constant 0 : index
    %90 = vector.load %arg5[%c2_109, %c0_110, %c2_111, %c0_112, %c0_113] : memref<8x1x3x8x128xf32, #tpu.memory_space<vmem>>, vector<1x1x1x2x128xf32>
    %91 = vector.shape_cast %90 : vector<1x1x1x2x128xf32> to vector<2x128xf32>
    %92 = vector.shape_cast %89 : vector<2x128xf32> to vector<1x1x1x2x128xf32>
    tpu.vector_store %arg5[%c2_109, %c0_110, %c2_111, %c0_112, %c0_113], %92 {strides = array<i32>} : memref<8x1x3x8x128xf32, #tpu.memory_space<vmem>>, vector<1x1x1x2x128xf32>,
    %c3 = arith.constant 3 : index
    %c0_114 = arith.constant 0 : index
    %c0_115 = arith.constant 0 : index
    %93 = vector.load %arg3[%c3, %c0_114, %c0_115] : memref<8x2x128xf32, #tpu.memory_space<vmem>>, vector<1x2x128xf32>
    %94 = vector.shape_cast %93 : vector<1x2x128xf32> to vector<2x128xf32>
    %cst_116 = arith.constant 5.000000e-01 : f32
    %95 = vector.broadcast %cst_116 : f32 to vector<2x128xf32>
    %96 = arith.mulf %95, %94 : vector<2x128xf32>
    %97 = math.tanh %96 : vector<2x128xf32>
    %cst_117 = arith.constant 5.000000e-01 : f32
    %98 = vector.broadcast %cst_117 : f32 to vector<2x128xf32>
    %99 = arith.mulf %98, %97 : vector<2x128xf32>
    %cst_118 = arith.constant 5.000000e-01 : f32
    %100 = vector.broadcast %cst_118 : f32 to vector<2x128xf32>
    %101 = arith.addf %99, %100 : vector<2x128xf32>
    %c3_119 = arith.constant 3 : index
    %c0_120 = arith.constant 0 : index
    %c0_121 = arith.constant 0 : index
    %102 = vector.load %arg4[%c3_119, %c0_120, %c0_121] : memref<8x2x128xf32, #tpu.memory_space<vmem>>, vector<1x2x128xf32>
    %103 = vector.shape_cast %102 : vector<1x2x128xf32> to vector<2x128xf32>
    %c3_122 = arith.constant 3 : index
    %c0_123 = arith.constant 0 : index
    %c0_124 = arith.constant 0 : index
    %c0_125 = arith.constant 0 : index
    %c0_126 = arith.constant 0 : index
    %104 = vector.load %arg5[%c3_122, %c0_123, %c0_124, %c0_125, %c0_126] : memref<8x1x3x8x128xf32, #tpu.memory_space<vmem>>, vector<1x1x1x2x128xf32>
    %105 = vector.shape_cast %104 : vector<1x1x1x2x128xf32> to vector<2x128xf32>
    %106 = arith.mulf %101, %103 : vector<2x128xf32>
    %107 = arith.addf %105, %106 : vector<2x128xf32>
    %c3_127 = arith.constant 3 : index
    %c0_128 = arith.constant 0 : index
    %c0_129 = arith.constant 0 : index
    %c0_130 = arith.constant 0 : index
    %c0_131 = arith.constant 0 : index
    %108 = vector.load %arg5[%c3_127, %c0_128, %c0_129, %c0_130, %c0_131] : memref<8x1x3x8x128xf32, #tpu.memory_space<vmem>>, vector<1x1x1x2x128xf32>
    %109 = vector.shape_cast %108 : vector<1x1x1x2x128xf32> to vector<2x128xf32>
    %110 = vector.shape_cast %107 : vector<2x128xf32> to vector<1x1x1x2x128xf32>
    tpu.vector_store %arg5[%c3_127, %c0_128, %c0_129, %c0_130, %c0_131], %110 {strides = array<i32>} : memref<8x1x3x8x128xf32, #tpu.memory_space<vmem>>, vector<1x1x1x2x128xf32>,
    %c3_132 = arith.constant 3 : index
    %c0_133 = arith.constant 0 : index
    %c1_134 = arith.constant 1 : index
    %c0_135 = arith.constant 0 : index
    %c0_136 = arith.constant 0 : index
    %111 = vector.load %arg5[%c3_132, %c0_133, %c1_134, %c0_135, %c0_136] : memref<8x1x3x8x128xf32, #tpu.memory_space<vmem>>, vector<1x1x1x2x128xf32>
    %112 = vector.shape_cast %111 : vector<1x1x1x2x128xf32> to vector<2x128xf32>
    %113 = arith.addf %112, %101 : vector<2x128xf32>
    %c3_137 = arith.constant 3 : index
    %c0_138 = arith.constant 0 : index
    %c1_139 = arith.constant 1 : index
    %c0_140 = arith.constant 0 : index
    %c0_141 = arith.constant 0 : index
    %114 = vector.load %arg5[%c3_137, %c0_138, %c1_139, %c0_140, %c0_141] : memref<8x1x3x8x128xf32, #tpu.memory_space<vmem>>, vector<1x1x1x2x128xf32>
    %115 = vector.shape_cast %114 : vector<1x1x1x2x128xf32> to vector<2x128xf32>
    %116 = vector.shape_cast %113 : vector<2x128xf32> to vector<1x1x1x2x128xf32>
    tpu.vector_store %arg5[%c3_137, %c0_138, %c1_139, %c0_140, %c0_141], %116 {strides = array<i32>} : memref<8x1x3x8x128xf32, #tpu.memory_space<vmem>>, vector<1x1x1x2x128xf32>,
    %c3_142 = arith.constant 3 : index
    %c0_143 = arith.constant 0 : index
    %c2_144 = arith.constant 2 : index
    %c0_145 = arith.constant 0 : index
    %c0_146 = arith.constant 0 : index
    %117 = vector.load %arg5[%c3_142, %c0_143, %c2_144, %c0_145, %c0_146] : memref<8x1x3x8x128xf32, #tpu.memory_space<vmem>>, vector<1x1x1x2x128xf32>
    %118 = vector.shape_cast %117 : vector<1x1x1x2x128xf32> to vector<2x128xf32>
    %119 = arith.addf %118, %103 : vector<2x128xf32>
    %c3_147 = arith.constant 3 : index
    %c0_148 = arith.constant 0 : index
    %c2_149 = arith.constant 2 : index
    %c0_150 = arith.constant 0 : index
    %c0_151 = arith.constant 0 : index
    %120 = vector.load %arg5[%c3_147, %c0_148, %c2_149, %c0_150, %c0_151] : memref<8x1x3x8x128xf32, #tpu.memory_space<vmem>>, vector<1x1x1x2x128xf32>
    %121 = vector.shape_cast %120 : vector<1x1x1x2x128xf32> to vector<2x128xf32>
    %122 = vector.shape_cast %119 : vector<2x128xf32> to vector<1x1x1x2x128xf32>
    tpu.vector_store %arg5[%c3_147, %c0_148, %c2_149, %c0_150, %c0_151], %122 {strides = array<i32>} : memref<8x1x3x8x128xf32, #tpu.memory_space<vmem>>, vector<1x1x1x2x128xf32>,
    %c4 = arith.constant 4 : index
    %c0_152 = arith.constant 0 : index
    %c0_153 = arith.constant 0 : index
    %123 = vector.load %arg3[%c4, %c0_152, %c0_153] : memref<8x2x128xf32, #tpu.memory_space<vmem>>, vector<1x2x128xf32>
    %124 = vector.shape_cast %123 : vector<1x2x128xf32> to vector<2x128xf32>
    %cst_154 = arith.constant 5.000000e-01 : f32
    %125 = vector.broadcast %cst_154 : f32 to vector<2x128xf32>
    %126 = arith.mulf %125, %124 : vector<2x128xf32>
    %127 = math.tanh %126 : vector<2x128xf32>
    %cst_155 = arith.constant 5.000000e-01 : f32
    %128 = vector.broadcast %cst_155 : f32 to vector<2x128xf32>
    %129 = arith.mulf %128, %127 : vector<2x128xf32>
    %cst_156 = arith.constant 5.000000e-01 : f32
    %130 = vector.broadcast %cst_156 : f32 to vector<2x128xf32>
    %131 = arith.addf %129, %130 : vector<2x128xf32>
    %c4_157 = arith.constant 4 : index
    %c0_158 = arith.constant 0 : index
    %c0_159 = arith.constant 0 : index
    %132 = vector.load %arg4[%c4_157, %c0_158, %c0_159] : memref<8x2x128xf32, #tpu.memory_space<vmem>>, vector<1x2x128xf32>
    %133 = vector.shape_cast %132 : vector<1x2x128xf32> to vector<2x128xf32>
    %c4_160 = arith.constant 4 : index
    %c0_161 = arith.constant 0 : index
    %c0_162 = arith.constant 0 : index
    %c0_163 = arith.constant 0 : index
    %c0_164 = arith.constant 0 : index
    %134 = vector.load %arg5[%c4_160, %c0_161, %c0_162, %c0_163, %c0_164] : memref<8x1x3x8x128xf32, #tpu.memory_space<vmem>>, vector<1x1x1x2x128xf32>
    %135 = vector.shape_cast %134 : vector<1x1x1x2x128xf32> to vector<2x128xf32>
    %136 = arith.mulf %131, %133 : vector<2x128xf32>
    %137 = arith.addf %135, %136 : vector<2x128xf32>
    %c4_165 = arith.constant 4 : index
    %c0_166 = arith.constant 0 : index
    %c0_167 = arith.constant 0 : index
    %c0_168 = arith.constant 0 : index
    %c0_169 = arith.constant 0 : index
    %138 = vector.load %arg5[%c4_165, %c0_166, %c0_167, %c0_168, %c0_169] : memref<8x1x3x8x128xf32, #tpu.memory_space<vmem>>, vector<1x1x1x2x128xf32>
    %139 = vector.shape_cast %138 : vector<1x1x1x2x128xf32> to vector<2x128xf32>
    %140 = vector.shape_cast %137 : vector<2x128xf32> to vector<1x1x1x2x128xf32>
    tpu.vector_store %arg5[%c4_165, %c0_166, %c0_167, %c0_168, %c0_169], %140 {strides = array<i32>} : memref<8x1x3x8x128xf32, #tpu.memory_space<vmem>>, vector<1x1x1x2x128xf32>,
    %c4_170 = arith.constant 4 : index
    %c0_171 = arith.constant 0 : index
    %c1_172 = arith.constant 1 : index
    %c0_173 = arith.constant 0 : index
    %c0_174 = arith.constant 0 : index
    %141 = vector.load %arg5[%c4_170, %c0_171, %c1_172, %c0_173, %c0_174] : memref<8x1x3x8x128xf32, #tpu.memory_space<vmem>>, vector<1x1x1x2x128xf32>
    %142 = vector.shape_cast %141 : vector<1x1x1x2x128xf32> to vector<2x128xf32>
    %143 = arith.addf %142, %131 : vector<2x128xf32>
    %c4_175 = arith.constant 4 : index
    %c0_176 = arith.constant 0 : index
    %c1_177 = arith.constant 1 : index
    %c0_178 = arith.constant 0 : index
    %c0_179 = arith.constant 0 : index
    %144 = vector.load %arg5[%c4_175, %c0_176, %c1_177, %c0_178, %c0_179] : memref<8x1x3x8x128xf32, #tpu.memory_space<vmem>>, vector<1x1x1x2x128xf32>
    %145 = vector.shape_cast %144 : vector<1x1x1x2x128xf32> to vector<2x128xf32>
    %146 = vector.shape_cast %143 : vector<2x128xf32> to vector<1x1x1x2x128xf32>
    tpu.vector_store %arg5[%c4_175, %c0_176, %c1_177, %c0_178, %c0_179], %146 {strides = array<i32>} : memref<8x1x3x8x128xf32, #tpu.memory_space<vmem>>, vector<1x1x1x2x128xf32>,
    %c4_180 = arith.constant 4 : index
    %c0_181 = arith.constant 0 : index
    %c2_182 = arith.constant 2 : index
    %c0_183 = arith.constant 0 : index
    %c0_184 = arith.constant 0 : index
    %147 = vector.load %arg5[%c4_180, %c0_181, %c2_182, %c0_183, %c0_184] : memref<8x1x3x8x128xf32, #tpu.memory_space<vmem>>, vector<1x1x1x2x128xf32>
    %148 = vector.shape_cast %147 : vector<1x1x1x2x128xf32> to vector<2x128xf32>
    %149 = arith.addf %148, %133 : vector<2x128xf32>
    %c4_185 = arith.constant 4 : index
    %c0_186 = arith.constant 0 : index
    %c2_187 = arith.constant 2 : index
    %c0_188 = arith.constant 0 : index
    %c0_189 = arith.constant 0 : index
    %150 = vector.load %arg5[%c4_185, %c0_186, %c2_187, %c0_188, %c0_189] : memref<8x1x3x8x128xf32, #tpu.memory_space<vmem>>, vector<1x1x1x2x128xf32>
    %151 = vector.shape_cast %150 : vector<1x1x1x2x128xf32> to vector<2x128xf32>
    %152 = vector.shape_cast %149 : vector<2x128xf32> to vector<1x1x1x2x128xf32>
    tpu.vector_store %arg5[%c4_185, %c0_186, %c2_187, %c0_188, %c0_189], %152 {strides = array<i32>} : memref<8x1x3x8x128xf32, #tpu.memory_space<vmem>>, vector<1x1x1x2x128xf32>,
    %c5 = arith.constant 5 : index
    %c0_190 = arith.constant 0 : index
    %c0_191 = arith.constant 0 : index
    %153 = vector.load %arg3[%c5, %c0_190, %c0_191] : memref<8x2x128xf32, #tpu.memory_space<vmem>>, vector<1x2x128xf32>
    %154 = vector.shape_cast %153 : vector<1x2x128xf32> to vector<2x128xf32>
    %cst_192 = arith.constant 5.000000e-01 : f32
    %155 = vector.broadcast %cst_192 : f32 to vector<2x128xf32>
    %156 = arith.mulf %155, %154 : vector<2x128xf32>
    %157 = math.tanh %156 : vector<2x128xf32>
    %cst_193 = arith.constant 5.000000e-01 : f32
    %158 = vector.broadcast %cst_193 : f32 to vector<2x128xf32>
    %159 = arith.mulf %158, %157 : vector<2x128xf32>
    %cst_194 = arith.constant 5.000000e-01 : f32
    %160 = vector.broadcast %cst_194 : f32 to vector<2x128xf32>
    %161 = arith.addf %159, %160 : vector<2x128xf32>
    %c5_195 = arith.constant 5 : index
    %c0_196 = arith.constant 0 : index
    %c0_197 = arith.constant 0 : index
    %162 = vector.load %arg4[%c5_195, %c0_196, %c0_197] : memref<8x2x128xf32, #tpu.memory_space<vmem>>, vector<1x2x128xf32>
    %163 = vector.shape_cast %162 : vector<1x2x128xf32> to vector<2x128xf32>
    %c5_198 = arith.constant 5 : index
    %c0_199 = arith.constant 0 : index
    %c0_200 = arith.constant 0 : index
    %c0_201 = arith.constant 0 : index
    %c0_202 = arith.constant 0 : index
    %164 = vector.load %arg5[%c5_198, %c0_199, %c0_200, %c0_201, %c0_202] : memref<8x1x3x8x128xf32, #tpu.memory_space<vmem>>, vector<1x1x1x2x128xf32>
    %165 = vector.shape_cast %164 : vector<1x1x1x2x128xf32> to vector<2x128xf32>
    %166 = arith.mulf %161, %163 : vector<2x128xf32>
    %167 = arith.addf %165, %166 : vector<2x128xf32>
    %c5_203 = arith.constant 5 : index
    %c0_204 = arith.constant 0 : index
    %c0_205 = arith.constant 0 : index
    %c0_206 = arith.constant 0 : index
    %c0_207 = arith.constant 0 : index
    %168 = vector.load %arg5[%c5_203, %c0_204, %c0_205, %c0_206, %c0_207] : memref<8x1x3x8x128xf32, #tpu.memory_space<vmem>>, vector<1x1x1x2x128xf32>
    %169 = vector.shape_cast %168 : vector<1x1x1x2x128xf32> to vector<2x128xf32>
    %170 = vector.shape_cast %167 : vector<2x128xf32> to vector<1x1x1x2x128xf32>
    tpu.vector_store %arg5[%c5_203, %c0_204, %c0_205, %c0_206, %c0_207], %170 {strides = array<i32>} : memref<8x1x3x8x128xf32, #tpu.memory_space<vmem>>, vector<1x1x1x2x128xf32>,
    %c5_208 = arith.constant 5 : index
    %c0_209 = arith.constant 0 : index
    %c1_210 = arith.constant 1 : index
    %c0_211 = arith.constant 0 : index
    %c0_212 = arith.constant 0 : index
    %171 = vector.load %arg5[%c5_208, %c0_209, %c1_210, %c0_211, %c0_212] : memref<8x1x3x8x128xf32, #tpu.memory_space<vmem>>, vector<1x1x1x2x128xf32>
    %172 = vector.shape_cast %171 : vector<1x1x1x2x128xf32> to vector<2x128xf32>
    %173 = arith.addf %172, %161 : vector<2x128xf32>
    %c5_213 = arith.constant 5 : index
    %c0_214 = arith.constant 0 : index
    %c1_215 = arith.constant 1 : index
    %c0_216 = arith.constant 0 : index
    %c0_217 = arith.constant 0 : index
    %174 = vector.load %arg5[%c5_213, %c0_214, %c1_215, %c0_216, %c0_217] : memref<8x1x3x8x128xf32, #tpu.memory_space<vmem>>, vector<1x1x1x2x128xf32>
    %175 = vector.shape_cast %174 : vector<1x1x1x2x128xf32> to vector<2x128xf32>
    %176 = vector.shape_cast %173 : vector<2x128xf32> to vector<1x1x1x2x128xf32>
    tpu.vector_store %arg5[%c5_213, %c0_214, %c1_215, %c0_216, %c0_217], %176 {strides = array<i32>} : memref<8x1x3x8x128xf32, #tpu.memory_space<vmem>>, vector<1x1x1x2x128xf32>,
    %c5_218 = arith.constant 5 : index
    %c0_219 = arith.constant 0 : index
    %c2_220 = arith.constant 2 : index
    %c0_221 = arith.constant 0 : index
    %c0_222 = arith.constant 0 : index
    %177 = vector.load %arg5[%c5_218, %c0_219, %c2_220, %c0_221, %c0_222] : memref<8x1x3x8x128xf32, #tpu.memory_space<vmem>>, vector<1x1x1x2x128xf32>
    %178 = vector.shape_cast %177 : vector<1x1x1x2x128xf32> to vector<2x128xf32>
    %179 = arith.addf %178, %163 : vector<2x128xf32>
    %c5_223 = arith.constant 5 : index
    %c0_224 = arith.constant 0 : index
    %c2_225 = arith.constant 2 : index
    %c0_226 = arith.constant 0 : index
    %c0_227 = arith.constant 0 : index
    %180 = vector.load %arg5[%c5_223, %c0_224, %c2_225, %c0_226, %c0_227] : memref<8x1x3x8x128xf32, #tpu.memory_space<vmem>>, vector<1x1x1x2x128xf32>
    %181 = vector.shape_cast %180 : vector<1x1x1x2x128xf32> to vector<2x128xf32>
    %182 = vector.shape_cast %179 : vector<2x128xf32> to vector<1x1x1x2x128xf32>
    tpu.vector_store %arg5[%c5_223, %c0_224, %c2_225, %c0_226, %c0_227], %182 {strides = array<i32>} : memref<8x1x3x8x128xf32, #tpu.memory_space<vmem>>, vector<1x1x1x2x128xf32>,
    %c6 = arith.constant 6 : index
    %c0_228 = arith.constant 0 : index
    %c0_229 = arith.constant 0 : index
    %183 = vector.load %arg3[%c6, %c0_228, %c0_229] : memref<8x2x128xf32, #tpu.memory_space<vmem>>, vector<1x2x128xf32>
    %184 = vector.shape_cast %183 : vector<1x2x128xf32> to vector<2x128xf32>
    %cst_230 = arith.constant 5.000000e-01 : f32
    %185 = vector.broadcast %cst_230 : f32 to vector<2x128xf32>
    %186 = arith.mulf %185, %184 : vector<2x128xf32>
    %187 = math.tanh %186 : vector<2x128xf32>
    %cst_231 = arith.constant 5.000000e-01 : f32
    %188 = vector.broadcast %cst_231 : f32 to vector<2x128xf32>
    %189 = arith.mulf %188, %187 : vector<2x128xf32>
    %cst_232 = arith.constant 5.000000e-01 : f32
    %190 = vector.broadcast %cst_232 : f32 to vector<2x128xf32>
    %191 = arith.addf %189, %190 : vector<2x128xf32>
    %c6_233 = arith.constant 6 : index
    %c0_234 = arith.constant 0 : index
    %c0_235 = arith.constant 0 : index
    %192 = vector.load %arg4[%c6_233, %c0_234, %c0_235] : memref<8x2x128xf32, #tpu.memory_space<vmem>>, vector<1x2x128xf32>
    %193 = vector.shape_cast %192 : vector<1x2x128xf32> to vector<2x128xf32>
    %c6_236 = arith.constant 6 : index
    %c0_237 = arith.constant 0 : index
    %c0_238 = arith.constant 0 : index
    %c0_239 = arith.constant 0 : index
    %c0_240 = arith.constant 0 : index
    %194 = vector.load %arg5[%c6_236, %c0_237, %c0_238, %c0_239, %c0_240] : memref<8x1x3x8x128xf32, #tpu.memory_space<vmem>>, vector<1x1x1x2x128xf32>
    %195 = vector.shape_cast %194 : vector<1x1x1x2x128xf32> to vector<2x128xf32>
    %196 = arith.mulf %191, %193 : vector<2x128xf32>
    %197 = arith.addf %195, %196 : vector<2x128xf32>
    %c6_241 = arith.constant 6 : index
    %c0_242 = arith.constant 0 : index
    %c0_243 = arith.constant 0 : index
    %c0_244 = arith.constant 0 : index
    %c0_245 = arith.constant 0 : index
    %198 = vector.load %arg5[%c6_241, %c0_242, %c0_243, %c0_244, %c0_245] : memref<8x1x3x8x128xf32, #tpu.memory_space<vmem>>, vector<1x1x1x2x128xf32>
    %199 = vector.shape_cast %198 : vector<1x1x1x2x128xf32> to vector<2x128xf32>
    %200 = vector.shape_cast %197 : vector<2x128xf32> to vector<1x1x1x2x128xf32>
    tpu.vector_store %arg5[%c6_241, %c0_242, %c0_243, %c0_244, %c0_245], %200 {strides = array<i32>} : memref<8x1x3x8x128xf32, #tpu.memory_space<vmem>>, vector<1x1x1x2x128xf32>,
    %c6_246 = arith.constant 6 : index
    %c0_247 = arith.constant 0 : index
    %c1_248 = arith.constant 1 : index
    %c0_249 = arith.constant 0 : index
    %c0_250 = arith.constant 0 : index
    %201 = vector.load %arg5[%c6_246, %c0_247, %c1_248, %c0_249, %c0_250] : memref<8x1x3x8x128xf32, #tpu.memory_space<vmem>>, vector<1x1x1x2x128xf32>
    %202 = vector.shape_cast %201 : vector<1x1x1x2x128xf32> to vector<2x128xf32>
    %203 = arith.addf %202, %191 : vector<2x128xf32>
    %c6_251 = arith.constant 6 : index
    %c0_252 = arith.constant 0 : index
    %c1_253 = arith.constant 1 : index
    %c0_254 = arith.constant 0 : index
    %c0_255 = arith.constant 0 : index
    %204 = vector.load %arg5[%c6_251, %c0_252, %c1_253, %c0_254, %c0_255] : memref<8x1x3x8x128xf32, #tpu.memory_space<vmem>>, vector<1x1x1x2x128xf32>
    %205 = vector.shape_cast %204 : vector<1x1x1x2x128xf32> to vector<2x128xf32>
    %206 = vector.shape_cast %203 : vector<2x128xf32> to vector<1x1x1x2x128xf32>
    tpu.vector_store %arg5[%c6_251, %c0_252, %c1_253, %c0_254, %c0_255], %206 {strides = array<i32>} : memref<8x1x3x8x128xf32, #tpu.memory_space<vmem>>, vector<1x1x1x2x128xf32>,
    %c6_256 = arith.constant 6 : index
    %c0_257 = arith.constant 0 : index
    %c2_258 = arith.constant 2 : index
    %c0_259 = arith.constant 0 : index
    %c0_260 = arith.constant 0 : index
    %207 = vector.load %arg5[%c6_256, %c0_257, %c2_258, %c0_259, %c0_260] : memref<8x1x3x8x128xf32, #tpu.memory_space<vmem>>, vector<1x1x1x2x128xf32>
    %208 = vector.shape_cast %207 : vector<1x1x1x2x128xf32> to vector<2x128xf32>
    %209 = arith.addf %208, %193 : vector<2x128xf32>
    %c6_261 = arith.constant 6 : index
    %c0_262 = arith.constant 0 : index
    %c2_263 = arith.constant 2 : index
    %c0_264 = arith.constant 0 : index
    %c0_265 = arith.constant 0 : index
    %210 = vector.load %arg5[%c6_261, %c0_262, %c2_263, %c0_264, %c0_265] : memref<8x1x3x8x128xf32, #tpu.memory_space<vmem>>, vector<1x1x1x2x128xf32>
    %211 = vector.shape_cast %210 : vector<1x1x1x2x128xf32> to vector<2x128xf32>
    %212 = vector.shape_cast %209 : vector<2x128xf32> to vector<1x1x1x2x128xf32>
    tpu.vector_store %arg5[%c6_261, %c0_262, %c2_263, %c0_264, %c0_265], %212 {strides = array<i32>} : memref<8x1x3x8x128xf32, #tpu.memory_space<vmem>>, vector<1x1x1x2x128xf32>,
    %c7 = arith.constant 7 : index
    %c0_266 = arith.constant 0 : index
    %c0_267 = arith.constant 0 : index
    %213 = vector.load %arg3[%c7, %c0_266, %c0_267] : memref<8x2x128xf32, #tpu.memory_space<vmem>>, vector<1x2x128xf32>
    %214 = vector.shape_cast %213 : vector<1x2x128xf32> to vector<2x128xf32>
    %cst_268 = arith.constant 5.000000e-01 : f32
    %215 = vector.broadcast %cst_268 : f32 to vector<2x128xf32>
    %216 = arith.mulf %215, %214 : vector<2x128xf32>
    %217 = math.tanh %216 : vector<2x128xf32>
    %cst_269 = arith.constant 5.000000e-01 : f32
    %218 = vector.broadcast %cst_269 : f32 to vector<2x128xf32>
    %219 = arith.mulf %218, %217 : vector<2x128xf32>
    %cst_270 = arith.constant 5.000000e-01 : f32
    %220 = vector.broadcast %cst_270 : f32 to vector<2x128xf32>
    %221 = arith.addf %219, %220 : vector<2x128xf32>
    %c7_271 = arith.constant 7 : index
    %c0_272 = arith.constant 0 : index
    %c0_273 = arith.constant 0 : index
    %222 = vector.load %arg4[%c7_271, %c0_272, %c0_273] : memref<8x2x128xf32, #tpu.memory_space<vmem>>, vector<1x2x128xf32>
    %223 = vector.shape_cast %222 : vector<1x2x128xf32> to vector<2x128xf32>
    %c7_274 = arith.constant 7 : index
    %c0_275 = arith.constant 0 : index
    %c0_276 = arith.constant 0 : index
    %c0_277 = arith.constant 0 : index
    %c0_278 = arith.constant 0 : index
    %224 = vector.load %arg5[%c7_274, %c0_275, %c0_276, %c0_277, %c0_278] : memref<8x1x3x8x128xf32, #tpu.memory_space<vmem>>, vector<1x1x1x2x128xf32>
    %225 = vector.shape_cast %224 : vector<1x1x1x2x128xf32> to vector<2x128xf32>
    %226 = arith.mulf %221, %223 : vector<2x128xf32>
    %227 = arith.addf %225, %226 : vector<2x128xf32>
    %c7_279 = arith.constant 7 : index
    %c0_280 = arith.constant 0 : index
    %c0_281 = arith.constant 0 : index
    %c0_282 = arith.constant 0 : index
    %c0_283 = arith.constant 0 : index
    %228 = vector.load %arg5[%c7_279, %c0_280, %c0_281, %c0_282, %c0_283] : memref<8x1x3x8x128xf32, #tpu.memory_space<vmem>>, vector<1x1x1x2x128xf32>
    %229 = vector.shape_cast %228 : vector<1x1x1x2x128xf32> to vector<2x128xf32>
    %230 = vector.shape_cast %227 : vector<2x128xf32> to vector<1x1x1x2x128xf32>
    tpu.vector_store %arg5[%c7_279, %c0_280, %c0_281, %c0_282, %c0_283], %230 {strides = array<i32>} : memref<8x1x3x8x128xf32, #tpu.memory_space<vmem>>, vector<1x1x1x2x128xf32>,
    %c7_284 = arith.constant 7 : index
    %c0_285 = arith.constant 0 : index
    %c1_286 = arith.constant 1 : index
    %c0_287 = arith.constant 0 : index
    %c0_288 = arith.constant 0 : index
    %231 = vector.load %arg5[%c7_284, %c0_285, %c1_286, %c0_287, %c0_288] : memref<8x1x3x8x128xf32, #tpu.memory_space<vmem>>, vector<1x1x1x2x128xf32>
    %232 = vector.shape_cast %231 : vector<1x1x1x2x128xf32> to vector<2x128xf32>
    %233 = arith.addf %232, %221 : vector<2x128xf32>
    %c7_289 = arith.constant 7 : index
    %c0_290 = arith.constant 0 : index
    %c1_291 = arith.constant 1 : index
    %c0_292 = arith.constant 0 : index
    %c0_293 = arith.constant 0 : index
    %234 = vector.load %arg5[%c7_289, %c0_290, %c1_291, %c0_292, %c0_293] : memref<8x1x3x8x128xf32, #tpu.memory_space<vmem>>, vector<1x1x1x2x128xf32>
    %235 = vector.shape_cast %234 : vector<1x1x1x2x128xf32> to vector<2x128xf32>
    %236 = vector.shape_cast %233 : vector<2x128xf32> to vector<1x1x1x2x128xf32>
    tpu.vector_store %arg5[%c7_289, %c0_290, %c1_291, %c0_292, %c0_293], %236 {strides = array<i32>} : memref<8x1x3x8x128xf32, #tpu.memory_space<vmem>>, vector<1x1x1x2x128xf32>,
    %c7_294 = arith.constant 7 : index
    %c0_295 = arith.constant 0 : index
    %c2_296 = arith.constant 2 : index
    %c0_297 = arith.constant 0 : index
    %c0_298 = arith.constant 0 : index
    %237 = vector.load %arg5[%c7_294, %c0_295, %c2_296, %c0_297, %c0_298] : memref<8x1x3x8x128xf32, #tpu.memory_space<vmem>>, vector<1x1x1x2x128xf32>
    %238 = vector.shape_cast %237 : vector<1x1x1x2x128xf32> to vector<2x128xf32>
    %239 = arith.addf %238, %223 : vector<2x128xf32>
    %c7_299 = arith.constant 7 : index
    %c0_300 = arith.constant 0 : index
    %c2_301 = arith.constant 2 : index
    %c0_302 = arith.constant 0 : index
    %c0_303 = arith.constant 0 : index
    %240 = vector.load %arg5[%c7_299, %c0_300, %c2_301, %c0_302, %c0_303] : memref<8x1x3x8x128xf32, #tpu.memory_space<vmem>>, vector<1x1x1x2x128xf32>
    %241 = vector.shape_cast %240 : vector<1x1x1x2x128xf32> to vector<2x128xf32>
    %242 = vector.shape_cast %239 : vector<2x128xf32> to vector<1x1x1x2x128xf32>
    tpu.vector_store %arg5[%c7_299, %c0_300, %c2_301, %c0_302, %c0_303], %242 {strides = array<i32>} : memref<8x1x3x8x128xf32, #tpu.memory_space<vmem>>, vector<1x1x1x2x128xf32>,
    return
  }
  func.func @transform_0(%arg0: i32, %arg1: i32, %arg2: i32) -> (i32, i32, i32) {
    %c1_i32 = arith.constant 1 : i32
    %0 = arith.muli %arg1, %c1_i32 : i32
    %1 = arith.addi %0, %arg2 : i32
    %c0_i32 = arith.constant 0 : i32
    %c0_i32_0 = arith.constant 0 : i32
    return %arg0, %1, %c0_i32 : i32, i32, i32
  }
  func.func @transform_1(%arg0: i32, %arg1: i32, %arg2: i32) -> (i32, i32, i32) {
    %c1_i32 = arith.constant 1 : i32
    %0 = arith.muli %arg1, %c1_i32 : i32
    %1 = arith.addi %0, %arg2 : i32
    %c0_i32 = arith.constant 0 : i32
    %c0_i32_0 = arith.constant 0 : i32
    return %arg0, %1, %c0_i32 : i32, i32, i32
  }
  func.func @transform_2(%arg0: i32, %arg1: i32, %arg2: i32) -> (i32, i32, i32, i32, i32) {
    %c0_i32 = arith.constant 0 : i32
    %c0_i32_0 = arith.constant 0 : i32
    %c0_i32_1 = arith.constant 0 : i32
    %c0_i32_2 = arith.constant 0 : i32
    return %arg0, %arg1, %c0_i32, %c0_i32_0, %c0_i32_1 : i32, i32, i32, i32, i32
  }
}

</mosaic_0001>

<llo_original>
// kernel: tpu_custom_call.1
$region0: #{tpu_custom_call.1}
  #allocation0 [shape = 'u32[]', space=smem, size = 0x4, offset = 0x4, fixed_abs, tag = 'smem constant byte address 0x4 - core index']
  #allocation1 [shape = 'u32[72,128]{1,0:T(1,128)}', space=vmem, size = 0x9000, scoped, tag = 'internal scratch']
  %s0 = inlined_call_operand.hbm [shape: f32[8,2,128], index: 0, kind: input, shape index: {}]
  %s1 = inlined_call_operand.hbm [shape: f32[8,2,128], index: 1, kind: input, shape index: {}]
  %s2 = inlined_call_operand.hbm [shape: f32[8,1,3,8,128], index: 2, kind: output, shape index: {}]
  %s3 = sld [smem:[#allocation0]]
  $region30: #{tpu_custom_call.1} parent=0
    _
  %s5 = ssub.s32 1, %s3
  %s6 = scalar_select 0, %s5, %s3
  $region1: #{tpu_custom_call.1} parent=0
    #allocation2 [shape = 'u8[8192]{0}', space=vmem, size = 0x2000, scoped, tag = 'input window, operand 0, single buffered']
    #allocation3 [shape = 's32[1]{0}', space=sflag, size = 0x4, scoped, tag = 'scoped memory for tpu_custom_call.1']
    #allocation4 [shape = 's32[1]{0}', space=sflag, size = 0x4, scoped, tag = 'scoped memory for tpu_custom_call.1']
    #allocation5 [shape = 'u8[8192]{0}', space=vmem, size = 0x2000, scoped, tag = 'input window, operand 1, single buffered']
    #allocation6 [shape = 's32[1]{0}', space=sflag, size = 0x4, scoped, tag = 'scoped memory for tpu_custom_call.1']
    #allocation7 [shape = 'u8[98304]{0}', space=vmem, size = 0x18000, scoped, tag = 'output window, operand 0, single buffered']
    %7 = vsyncpa [#allocation3], 0
    %8 = vsyncpa [#allocation6], 0
    %9 = vsyncpa [#allocation4], 0
    // Predicated region
    $region2: #{tpu_custom_call.1} parent=1 // pred_check
      _
    $region3: #{tpu_custom_call.1} parent=1 // pred_check_branch
      %11 = sbr.rel (0) target = $region5
    $region4: #{tpu_custom_call.1} parent=1 // pred_region
      %s12 = sadd.s32 0, 0
      %14 = vsyncadd [#allocation3], 0
      %s15 = smul.addr %s12, 2
      %s16 = scalar_lea.hbm %s0, %s15
      %s17 = sshll.u32 %s16, 4
      %s18 = int_to_ptr.hbm [resolvable:$true] %s17
      %s19 = sshll.u32 [#allocation2], 4
      %s20 = int_to_ptr.vmem [resolvable:$true] %s19
      %25 = dma.hbm_to_vmem [thread:$0]  %s18, 256, %s20, [#allocation3], 32, 32, 2
    $region5: #{tpu_custom_call.1} parent=1 // pred_fallthru
      _
    // Predicated region
    $region6: #{tpu_custom_call.1} parent=1 // pred_check
      _
    $region7: #{tpu_custom_call.1} parent=1 // pred_check_branch
      %27 = sbr.rel (0) target = $region9
    $region8: #{tpu_custom_call.1} parent=1 // pred_region
      %s28 = sadd.s32 0, 0
      %30 = vsyncadd [#allocation6], 0
      %s31 = smul.addr %s28, 2
      %s32 = scalar_lea.hbm %s1, %s31
      %s33 = sshll.u32 %s32, 4
      %s34 = int_to_ptr.hbm [resolvable:$true] %s33
      %s35 = sshll.u32 [#allocation5], 4
      %s36 = int_to_ptr.vmem [resolvable:$true] %s35
      %41 = dma.hbm_to_vmem [thread:$0]  %s34, 256, %s36, [#allocation6], 32, 32, 2
    $region9: #{tpu_custom_call.1} parent=1 // pred_fallthru
      _
    // Predicated region
    $region10: #{tpu_custom_call.1} parent=1 // pred_check
      _
    $region11: #{tpu_custom_call.1} parent=1 // pred_check_branch
      %43 = sbr.rel (0) target = $region13
    $region12: #{tpu_custom_call.1} parent=1 // pred_region
      %45 = dma.done [#allocation3], 256
    $region13: #{tpu_custom_call.1} parent=1 // pred_fallthru
      _
    // Predicated region
    $region14: #{tpu_custom_call.1} parent=1 // pred_check
      _
    $region15: #{tpu_custom_call.1} parent=1 // pred_check_branch
      %47 = sbr.rel (0) target = $region17
    $region16: #{tpu_custom_call.1} parent=1 // pred_region
      %49 = dma.done [#allocation6], 256
    $region17: #{tpu_custom_call.1} parent=1 // pred_fallthru
      _
    %s50 = sadd.s32 0, 0
    %s51 = sadd.s32 0, 0
    %p52 = scmp.eq.s32.totalorder 0, 0
    // Predicated region
    $region18: #{tpu_custom_call.1} parent=1 // pred_check
      %p53 = pneg %p52
    $region19: #{tpu_custom_call.1} parent=1 // pred_check_branch
      %55 = sbr.rel (%p53) target = $region21
    $region20: #{tpu_custom_call.1} parent=1 // pred_region
      %56 = vst [vmem:[#allocation7] sm:$0xff] 0.0
      %57 = vst [vmem:[#allocation7 + $0x8] sm:$0xff] 0.0
      %58 = vst [vmem:[#allocation7 + $0x10] sm:$0xff] 0.0
      %59 = vst [vmem:[#allocation7 + $0x18] sm:$0xff] 0.0
      %60 = vst [vmem:[#allocation7 + $0x20] sm:$0xff] 0.0
      %61 = vst [vmem:[#allocation7 + $0x28] sm:$0xff] 0.0
      %62 = vst [vmem:[#allocation7 + $0x30] sm:$0xff] 0.0
      %63 = vst [vmem:[#allocation7 + $0x38] sm:$0xff] 0.0
      %64 = vst [vmem:[#allocation7 + $0x40] sm:$0xff] 0.0
      %65 = vst [vmem:[#allocation7 + $0x48] sm:$0xff] 0.0
      %66 = vst [vmem:[#allocation7 + $0x50] sm:$0xff] 0.0
      %67 = vst [vmem:[#allocation7 + $0x58] sm:$0xff] 0.0
      %68 = vst [vmem:[#allocation7 + $0x60] sm:$0xff] 0.0
      %69 = vst [vmem:[#allocation7 + $0x68] sm:$0xff] 0.0
      %70 = vst [vmem:[#allocation7 + $0x70] sm:$0xff] 0.0
      %71 = vst [vmem:[#allocation7 + $0x78] sm:$0xff] 0.0
      %72 = vst [vmem:[#allocation7 + $0x80] sm:$0xff] 0.0
      %73 = vst [vmem:[#allocation7 + $0x88] sm:$0xff] 0.0
      %74 = vst [vmem:[#allocation7 + $0x90] sm:$0xff] 0.0
      %75 = vst [vmem:[#allocation7 + $0x98] sm:$0xff] 0.0
      %76 = vst [vmem:[#allocation7 + $0xa0] sm:$0xff] 0.0
      %77 = vst [vmem:[#allocation7 + $0xa8] sm:$0xff] 0.0
      %78 = vst [vmem:[#allocation7 + $0xb0] sm:$0xff] 0.0
      %79 = vst [vmem:[#allocation7 + $0xb8] sm:$0xff] 0.0
    $region21: #{tpu_custom_call.1} parent=1 // pred_fallthru
      _
    %v80 = vld [vmem:[#allocation2] sm:$0x3]
    %v81 = vmul.f32 %v80, 0.5
    %v82 = vtanh.pop %v81
    %v83 = vmul.f32 %v82, 0.5
    %v84 = vadd.f32 %v83, 0.5
    %v85 = vld [vmem:[#allocation5] sm:$0x3]
    %v86 = vld [vmem:[#allocation7] sm:$0x3]
    %v87 = vmul.f32 %v84, %v85
    %v88 = vadd.f32 %v86, %v87
    %89 = vst [vmem:[#allocation7] sm:$0x3] %v88
    %s90 = scalar_lea.vmem [#allocation7], 8
    %v91 = vld [vmem:[%s90] sm:$0x3]
    %v92 = vadd.f32 %v91, %v84
    %93 = vst [vmem:[%s90] sm:$0x3] %v92
    %s94 = scalar_lea.vmem [#allocation7], 16
    %v95 = vld [vmem:[%s94] sm:$0x3]
    %v96 = vadd.f32 %v95, %v85
    %97 = vst [vmem:[%s94] sm:$0x3] %v96
    %s98 = scalar_lea.vmem [#allocation2], 2
    %v99 = vld [vmem:[%s98] sm:$0x3]
    %v100 = vmul.f32 %v99, 0.5
    %v101 = vtanh.pop %v100
    %v102 = vmul.f32 %v101, 0.5
    %v103 = vadd.f32 %v102, 0.5
    %s104 = scalar_lea.vmem [#allocation5], 2
    %v105 = vld [vmem:[%s104] sm:$0x3]
    %s106 = scalar_lea.vmem [#allocation7], 24
    %v107 = vld [vmem:[%s106] sm:$0x3]
    %v108 = vmul.f32 %v103, %v105
    %v109 = vadd.f32 %v107, %v108
    %110 = vst [vmem:[%s106] sm:$0x3] %v109
    %s111 = scalar_lea.vmem [#allocation7], 32
    %v112 = vld [vmem:[%s111] sm:$0x3]
    %v113 = vadd.f32 %v112, %v103
    %114 = vst [vmem:[%s111] sm:$0x3] %v113
    %s115 = scalar_lea.vmem [#allocation7], 40
    %v116 = vld [vmem:[%s115] sm:$0x3]
    %v117 = vadd.f32 %v116, %v105
    %118 = vst [vmem:[%s115] sm:$0x3] %v117
    %s119 = scalar_lea.vmem [#allocation2], 4
    %v120 = vld [vmem:[%s119] sm:$0x3]
    %v121 = vmul.f32 %v120, 0.5
    %v122 = vtanh.pop %v121
    %v123 = vmul.f32 %v122, 0.5
    %v124 = vadd.f32 %v123, 0.5
    %s125 = scalar_lea.vmem [#allocation5], 4
    %v126 = vld [vmem:[%s125] sm:$0x3]
    %s127 = scalar_lea.vmem [#allocation7], 48
    %v128 = vld [vmem:[%s127] sm:$0x3]
    %v129 = vmul.f32 %v124, %v126
    %v130 = vadd.f32 %v128, %v129
    %131 = vst [vmem:[%s127] sm:$0x3] %v130
    %s132 = scalar_lea.vmem [#allocation7], 56
    %v133 = vld [vmem:[%s132] sm:$0x3]
    %v134 = vadd.f32 %v133, %v124
    %135 = vst [vmem:[%s132] sm:$0x3] %v134
    %s136 = scalar_lea.vmem [#allocation7], 64
    %v137 = vld [vmem:[%s136] sm:$0x3]
    %v138 = vadd.f32 %v137, %v126
    %139 = vst [vmem:[%s136] sm:$0x3] %v138
    %s140 = scalar_lea.vmem [#allocation2], 6
    %v141 = vld [vmem:[%s140] sm:$0x3]
    %v142 = vmul.f32 %v141, 0.5
    %v143 = vtanh.pop %v142
    %v144 = vmul.f32 %v143, 0.5
    %v145 = vadd.f32 %v144, 0.5
    %s146 = scalar_lea.vmem [#allocation5], 6
    %v147 = vld [vmem:[%s146] sm:$0x3]
    %s148 = scalar_lea.vmem [#allocation7], 72
    %v149 = vld [vmem:[%s148] sm:$0x3]
    %v150 = vmul.f32 %v145, %v147
    %v151 = vadd.f32 %v149, %v150
    %152 = vst [vmem:[%s148] sm:$0x3] %v151
    %s153 = scalar_lea.vmem [#allocation7], 80
    %v154 = vld [vmem:[%s153] sm:$0x3]
    %v155 = vadd.f32 %v154, %v145
    %156 = vst [vmem:[%s153] sm:$0x3] %v155
    %s157 = scalar_lea.vmem [#allocation7], 88
    %v158 = vld [vmem:[%s157] sm:$0x3]
    %v159 = vadd.f32 %v158, %v147
    %160 = vst [vmem:[%s157] sm:$0x3] %v159
    %s161 = scalar_lea.vmem [#allocation2], 8
    %v162 = vld [vmem:[%s161] sm:$0x3]
    %v163 = vmul.f32 %v162, 0.5
    %v164 = vtanh.pop %v163
    %v165 = vmul.f32 %v164, 0.5
    %v166 = vadd.f32 %v165, 0.5
    %s167 = scalar_lea.vmem [#allocation5], 8
    %v168 = vld [vmem:[%s167] sm:$0x3]
    %s169 = scalar_lea.vmem [#allocation7], 96
    %v170 = vld [vmem:[%s169] sm:$0x3]
    %v171 = vmul.f32 %v166, %v168
    %v172 = vadd.f32 %v170, %v171
    %173 = vst [vmem:[%s169] sm:$0x3] %v172
    %s174 = scalar_lea.vmem [#allocation7], 104
    %v175 = vld [vmem:[%s174] sm:$0x3]
    %v176 = vadd.f32 %v175, %v166
    %177 = vst [vmem:[%s174] sm:$0x3] %v176
    %s178 = scalar_lea.vmem [#allocation7], 112
    %v179 = vld [vmem:[%s178] sm:$0x3]
    %v180 = vadd.f32 %v179, %v168
    %181 = vst [vmem:[%s178] sm:$0x3] %v180
    %s182 = scalar_lea.vmem [#allocation2], 10
    %v183 = vld [vmem:[%s182] sm:$0x3]
    %v184 = vmul.f32 %v183, 0.5
    %v185 = vtanh.pop %v184
    %v186 = vmul.f32 %v185, 0.5
    %v187 = vadd.f32 %v186, 0.5
    %s188 = scalar_lea.vmem [#allocation5], 10
    %v189 = vld [vmem:[%s188] sm:$0x3]
    %s190 = scalar_lea.vmem [#allocation7], 120
    %v191 = vld [vmem:[%s190] sm:$0x3]
    %v192 = vmul.f32 %v187, %v189
    %v193 = vadd.f32 %v191, %v192
    %194 = vst [vmem:[%s190] sm:$0x3] %v193
    %s195 = scalar_lea.vmem [#allocation7], 128
    %v196 = vld [vmem:[%s195] sm:$0x3]
    %v197 = vadd.f32 %v196, %v187
    %198 = vst [vmem:[%s195] sm:$0x3] %v197
    %s199 = scalar_lea.vmem [#allocation7], 136
    %v200 = vld [vmem:[%s199] sm:$0x3]
    %v201 = vadd.f32 %v200, %v189
    %202 = vst [vmem:[%s199] sm:$0x3] %v201
    %s203 = scalar_lea.vmem [#allocation2], 12
    %v204 = vld [vmem:[%s203] sm:$0x3]
    %v205 = vmul.f32 %v204, 0.5
    %v206 = vtanh.pop %v205
    %v207 = vmul.f32 %v206, 0.5
    %v208 = vadd.f32 %v207, 0.5
    %s209 = scalar_lea.vmem [#allocation5], 12
    %v210 = vld [vmem:[%s209] sm:$0x3]
    %s211 = scalar_lea.vmem [#allocation7], 144
    %v212 = vld [vmem:[%s211] sm:$0x3]
    %v213 = vmul.f32 %v208, %v210
    %v214 = vadd.f32 %v212, %v213
    %215 = vst [vmem:[%s211] sm:$0x3] %v214
    %s216 = scalar_lea.vmem [#allocation7], 152
    %v217 = vld [vmem:[%s216] sm:$0x3]
    %v218 = vadd.f32 %v217, %v208
    %219 = vst [vmem:[%s216] sm:$0x3] %v218
    %s220 = scalar_lea.vmem [#allocation7], 160
    %v221 = vld [vmem:[%s220] sm:$0x3]
    %v222 = vadd.f32 %v221, %v210
    %223 = vst [vmem:[%s220] sm:$0x3] %v222
    %s224 = scalar_lea.vmem [#allocation2], 14
    %v225 = vld [vmem:[%s224] sm:$0x3]
    %v226 = vmul.f32 %v225, 0.5
    %v227 = vtanh.pop %v226
    %v228 = vmul.f32 %v227, 0.5
    %v229 = vadd.f32 %v228, 0.5
    %s230 = scalar_lea.vmem [#allocation5], 14
    %v231 = vld [vmem:[%s230] sm:$0x3]
    %s232 = scalar_lea.vmem [#allocation7], 168
    %v233 = vld [vmem:[%s232] sm:$0x3]
    %v234 = vmul.f32 %v229, %v231
    %v235 = vadd.f32 %v233, %v234
    %236 = vst [vmem:[%s232] sm:$0x3] %v235
    %s237 = scalar_lea.vmem [#allocation7], 176
    %v238 = vld [vmem:[%s237] sm:$0x3]
    %v239 = vadd.f32 %v238, %v229
    %240 = vst [vmem:[%s237] sm:$0x3] %v239
    %s241 = scalar_lea.vmem [#allocation7], 184
    %v242 = vld [vmem:[%s241] sm:$0x3]
    %v243 = vadd.f32 %v242, %v231
    %244 = vst [vmem:[%s241] sm:$0x3] %v243
    // Predicated region
    $region22: #{tpu_custom_call.1} parent=1 // pred_check
      _
    $region23: #{tpu_custom_call.1} parent=1 // pred_check_branch
      %246 = sbr.rel (0) target = $region25
    $region24: #{tpu_custom_call.1} parent=1 // pred_region
      %248 = vsyncadd [#allocation4], 0
      %s249 = sshll.u32 [#allocation7], 4
      %s250 = int_to_ptr.vmem [resolvable:$true] %s249
      %s251 = sshll.u32 %s2, 4
      %s252 = int_to_ptr.hbm [resolvable:$true] %s251
      %257 = dma.vmem_to_hbm [thread:$0]  %s250, 3072, %s252, [#allocation4], 128, 128, 8
    $region25: #{tpu_custom_call.1} parent=1 // pred_fallthru
      _
    // Predicated region
    $region26: #{tpu_custom_call.1} parent=1 // pred_check
      _
    $region27: #{tpu_custom_call.1} parent=1 // pred_check_branch
      %259 = sbr.rel (0) target = $region29
    $region28: #{tpu_custom_call.1} parent=1 // pred_region
      %261 = dma.done [#allocation4], 3072
    $region29: #{tpu_custom_call.1} parent=1 // pred_fallthru
      _
    %262 = vsyncpa [#allocation3], 1
    %263 = vsyncpa [#allocation6], 1
    %264 = vsyncpa [#allocation4], 1

</llo_original>
